<compile_context>
chip_gen: v6e
topology: v6e:2x2x1
jax: 0.10.0
libtpu: 0.0.40
codegen_flags: <defaults>
</compile_context>

<pallas_src>
import functools

import jax
import jax.numpy as jnp
from jax.experimental import pallas as pl
from jax.experimental.pallas import tpu as pltpu

_LANES = 128
_NUM_CORES = 2                      # v7x has 2 TCs; harmless (sequential) on v5e/v6e
_MAX_TILE_BYTES = 2 * 1024 * 1024   # per input per pipeline buffer


def _single_tile_kernel(x_ref, y_ref, o_ref, *, inv_n):
    # Whole problem fits in one VMEM tile: no accumulator machinery.
    x = x_ref[...].astype(jnp.float32)
    y = y_ref[...].astype(jnp.float32)
    t = jnp.maximum(y * inv_n - x, 0.0) + x * y
    # Per-lane partial sums; the final 128-wide reduce happens in the wrapper.
    o_ref[...] = -jnp.sum(t, axis=0, keepdims=True)


def _tiled_kernel(x_ref, y_ref, o_ref, acc_ref, *, inv_n, rows_per_tile,
                  tiles_per_core, total_rows):
    c = pl.program_id(0)        # core / partial-output index ("parallel")
    t_idx = pl.program_id(1)    # streaming reduction axis ("arbitrary")

    @pl.when(t_idx == 0)
    def _init():
        acc_ref[...] = jnp.zeros_like(acc_ref)

    # Global data-tile index.  It may point past the last real tile (a phantom
    # tile on one core when num_tiles is odd); its DMA is clamped in the
    # index_map and its contribution is fully masked out here.
    g = c * tiles_per_core + t_idx
    valid_rows = total_rows - g * rows_per_tile

    x = x_ref[...].astype(jnp.float32)
    y = y_ref[...].astype(jnp.float32)
    # Fused single pass: sum(relu(y/n - x)) + sum(x*y) == sum(relu(y/n-x) + x*y)
    t = jnp.maximum(y * inv_n - x, 0.0) + x * y

    # Mask rows beyond the end of the data (partial last tile / phantom tile).
    row_ids = jax.lax.broadcasted_iota(jnp.int32, t.shape, 0)
    t = jnp.where(row_ids < valid_rows, t, 0.0)

    # vreg-shaped accumulator: pure VPU adds in the hot loop (no cross-lane
    # work, no masked (1,1) store).  rows_per_tile is a multiple of 8 so the
    # reshape is a free, tiling-aligned split of the sublane dimension.
    acc_ref[...] += t.reshape(-1, 8, _LANES).sum(axis=0)

    @pl.when(t_idx == tiles_per_core - 1)
    def _finalize():
        # One sublane reduce per core; cross-lane reduce is done in the wrapper.
        o_ref[...] = -jnp.sum(acc_ref[...], axis=0, keepdims=True)


def metric_layer_forward(x: jax.Array, y: jax.Array,
                         *, max_tile_bytes: int = _MAX_TILE_BYTES) -> jax.Array:
    """Pallas implementation of MetricLayer.forward(input, target)."""
    if x.ndim != 1:
        raise ValueError("Input must be a vector")
    if y.shape != x.shape:
        raise ValueError("target must have the same shape as input")
    n = x.shape[0]
    inv_n = 1.0 / float(n)

    # No host-side copy in the common n % 128 == 0 case: reshape is free.
    # Otherwise a single minimal pad to the next 128 boundary (zero is exact
    # for both fused terms: relu(0/n - 0) = 0 and 0*0 = 0).  The row remainder
    # is handled by the in-kernel mask, never by padding to a tile multiple.
    rem = n % _LANES
    if rem:
        pad = _LANES - rem
        x = jnp.pad(x, (0, pad))
        y = jnp.pad(y, (0, pad))
    rows = x.shape[0] // _LANES
    x2 = x.reshape(rows, _LANES)   # free bitcast reshape
    y2 = y.reshape(rows, _LANES)

    # Byte-based, dtype-aware tile sizing (bf16 gets 2x the rows of f32, etc.).
    itemsize = max(x2.dtype.itemsize, y2.dtype.itemsize)
    rows_per_tile = max_tile_bytes // (_LANES * itemsize)
    rows_per_tile = max(32, (rows_per_tile // 32) * 32)   # whole packed vregs

    bytes_in = x2.size * x2.dtype.itemsize + y2.size * y2.dtype.itemsize

    if rows <= rows_per_tile:
        # -------- single-tile fast path --------
        out = pl.pallas_call(
            functools.partial(_single_tile_kernel, inv_n=inv_n),
            out_shape=jax.ShapeDtypeStruct((1, _LANES), jnp.float32),
            grid=(1,),
            in_specs=[
                pl.BlockSpec((rows, _LANES), lambda i: (0, 0)),
                pl.BlockSpec((rows, _LANES), lambda i: (0, 0)),
            ],
            out_specs=pl.BlockSpec((1, _LANES), lambda i: (0, 0)),
            compiler_params=pltpu.CompilerParams(
                dimension_semantics=("arbitrary",),
                vmem_limit_bytes=32 * 1024 * 1024,
            ),
            cost_estimate=pl.CostEstimate(
                flops=5 * x2.size, transcendentals=0,
                bytes_accessed=bytes_in + 4 * _LANES),
        )(x2, y2)
        return jnp.sum(out).reshape(1)

    # -------- tiled streaming path (dual-core capable) --------
    num_tiles = -(-rows // rows_per_tile)
    num_cores = _NUM_CORES if num_tiles >= 2 else 1
    tiles_per_core = -(-num_tiles // num_cores)

    def in_map(c, t):
        # Clamp the phantom tile (odd num_tiles) onto the last real tile; its
        # contribution is masked to zero inside the kernel.
        return (jnp.minimum(c * tiles_per_core + t, num_tiles - 1), 0)

    kernel = functools.partial(
        _tiled_kernel, inv_n=inv_n, rows_per_tile=rows_per_tile,
        tiles_per_core=tiles_per_core, total_rows=rows)

    out = pl.pallas_call(
        kernel,
        out_shape=jax.ShapeDtypeStruct((1, num_cores * _LANES), jnp.float32),
        grid=(num_cores, tiles_per_core),
        in_specs=[
            pl.BlockSpec((rows_per_tile, _LANES), in_map),
            pl.BlockSpec((rows_per_tile, _LANES), in_map),
        ],
        out_specs=pl.BlockSpec((1, _LANES), lambda c, t: (0, c)),
        scratch_shapes=[pltpu.VMEM((8, _LANES), jnp.float32)],
        compiler_params=pltpu.CompilerParams(
            dimension_semantics=("parallel", "arbitrary"),
            vmem_limit_bytes=32 * 1024 * 1024,   # buffers <= 8 MiB; safe on v7x
        ),
        cost_estimate=pl.CostEstimate(
            flops=5 * x2.size, transcendentals=0,
            bytes_accessed=bytes_in + 4 * num_cores * _LANES),
    )(x2, y2)
    # Tiny wrapper-side reduce of the per-core / per-lane partials.
    return jnp.sum(out).reshape(1)


def _reference_forward(x: jax.Array, y: jax.Array) -> jax.Array:
    n = x.shape[0]
    xf = x.astype(jnp.float32)
    yf = y.astype(jnp.float32)
    obj = jnp.sum(jnp.maximum(yf / n - xf, 0.0)) + jnp.sum(xf * yf)
    return (-obj).reshape(1)


if __name__ == "__main__":
    key = jax.random.PRNGKey(0)

    def run_case(n, dtype, max_tile_bytes=_MAX_TILE_BYTES):
        k1, k2 = jax.random.split(jax.random.fold_in(key, n))
        x = jax.random.normal(k1, (n,), dtype=jnp.float32).astype(dtype)   # scores psi
        y = jax.random.bernoulli(k2, 0.5, (n,)).astype(dtype)              # binary targets
        out = jax.block_until_ready(
            metric_layer_forward(x, y, max_tile_bytes=max_tile_bytes))
        ref = _reference_forward(x, y)
        assert out.shape == (1,), (n, out.shape)
        assert out.dtype == jnp.float32, (n, out.dtype)
        assert jnp.allclose(out, ref, rtol=1e-4, atol=1e-3), (n, dtype, out, ref)

    # Small 1-D vector sizes, consistent with the module's vector input.
    run_case(300, jnp.float32)               # lane tail + single-tile fast path
    run_case(2048, jnp.float32)              # n % 128 == 0 -> zero-copy fast path
    run_case(2048, jnp.bfloat16)             # narrow dtype, packed tiles
    # Small tiles force the tiled / dual-core / masked path at small sizes:
    run_case(12800, jnp.float32, max_tile_bytes=16 * 1024)  # partial last tile
    run_case(8997, jnp.float32, max_tile_bytes=16 * 1024)   # lane tail + phantom tile

    print("KERNEL_OK")
</pallas_src>

<mosaic_0001>
module attributes {stable_mosaic.version = 11 : i64} {
  func.func @_single_tile_kernel(%arg0: i32, %arg1: memref<3x128xf32, #tpu.memory_space<vmem>>, %arg2: memref<3x128xf32, #tpu.memory_space<vmem>>, %arg3: memref<1x128xf32, #tpu.memory_space<vmem>>) attributes {dimension_semantics = [#tpu.dimension_semantics<arbitrary>], iteration_bounds = array<i64: 1>, scalar_prefetch = 0 : i64, scratch_operands = 0 : i64, tpu.core_type = #tpu.core_type<tc>, window_params = [{pipeline_mode = #tpu.pipeline_mode<synchronous>, transform_indices = @transform_0, window_bounds = array<i64: 3, 128>}, {pipeline_mode = #tpu.pipeline_mode<synchronous>, transform_indices = @transform_1, window_bounds = array<i64: 3, 128>}, {pipeline_mode = #tpu.pipeline_mode<synchronous>, transform_indices = @transform_2, window_bounds = array<i64: 1, 128>}]} {
    %c0 = arith.constant 0 : index
    %c0_0 = arith.constant 0 : index
    %0 = vector.load %arg1[%c0, %c0_0] : memref<3x128xf32, #tpu.memory_space<vmem>>, vector<3x128xf32>
    %c0_1 = arith.constant 0 : index
    %c0_2 = arith.constant 0 : index
    %1 = vector.load %arg2[%c0_1, %c0_2] : memref<3x128xf32, #tpu.memory_space<vmem>>, vector<3x128xf32>
    %cst = arith.constant 0.00333333341 : f32
    %2 = vector.broadcast %cst : f32 to vector<3x128xf32>
    %3 = arith.mulf %1, %2 : vector<3x128xf32>
    %4 = arith.subf %3, %0 : vector<3x128xf32>
    %cst_3 = arith.constant 0.000000e+00 : f32
    %5 = vector.broadcast %cst_3 : f32 to vector<3x128xf32>
    %6 = arith.maximumf %4, %5 : vector<3x128xf32>
    %7 = arith.mulf %0, %1 : vector<3x128xf32>
    %8 = arith.addf %6, %7 : vector<3x128xf32>
    %cst_4 = arith.constant dense<0.000000e+00> : vector<128xf32>
    %9 = vector.multi_reduction <add>, %8, %cst_4 [0] : vector<3x128xf32> to vector<128xf32>
    %10 = vector.shape_cast %9 : vector<128xf32> to vector<1x128xf32>
    %cst_5 = arith.constant 0.000000e+00 : f32
    %11 = vector.broadcast %cst_5 : f32 to vector<1x128xf32>
    %12 = arith.subf %11, %10 : vector<1x128xf32>
    %c0_6 = arith.constant 0 : index
    %c0_7 = arith.constant 0 : index
    %13 = vector.load %arg3[%c0_6, %c0_7] : memref<1x128xf32, #tpu.memory_space<vmem>>, vector<1x128xf32>
    tpu.vector_store %arg3[%c0_6, %c0_7], %12 {strides = array<i32>} : memref<1x128xf32, #tpu.memory_space<vmem>>, vector<1x128xf32>,
    return
  }
  func.func @transform_0(%arg0: i32) -> (i32, i32) {
    %c0_i32 = arith.constant 0 : i32
    %c0_i32_0 = arith.constant 0 : i32
    %c0_i32_1 = arith.constant 0 : i32
    return %c0_i32, %c0_i32_0 : i32, i32
  }
  func.func @transform_1(%arg0: i32) -> (i32, i32) {
    %c0_i32 = arith.constant 0 : i32
    %c0_i32_0 = arith.constant 0 : i32
    %c0_i32_1 = arith.constant 0 : i32
    return %c0_i32, %c0_i32_0 : i32, i32
  }
  func.func @transform_2(%arg0: i32) -> (i32, i32) {
    %c0_i32 = arith.constant 0 : i32
    %c0_i32_0 = arith.constant 0 : i32
    %c0_i32_1 = arith.constant 0 : i32
    return %c0_i32, %c0_i32_0 : i32, i32
  }
}

</mosaic_0001>

<llo_original>
// kernel: tpu_custom_call.1
$region0: #{tpu_custom_call.1}
  #allocation0 [shape = 'u32[]', space=smem, size = 0x4, offset = 0x4, fixed_abs, tag = 'smem constant byte address 0x4 - core index']
  #allocation1 [shape = 'u32[144,128]{1,0:T(1,128)}', space=vmem, size = 0x12000, scoped, tag = 'internal scratch']
  %s0 = inlined_call_operand.hbm [shape: f32[3,128], index: 0, kind: input, shape index: {}]
  %s1 = inlined_call_operand.hbm [shape: f32[3,128], index: 1, kind: input, shape index: {}]
  %s2 = inlined_call_operand.hbm [shape: f32[1,128], index: 2, kind: output, shape index: {}]
  %s3 = sld [smem:[#allocation0]]
  $region26: #{tpu_custom_call.1} parent=0
    _
  %s5 = ssub.s32 1, %s3
  %s6 = scalar_select 0, %s5, %s3
  $region1: #{tpu_custom_call.1} parent=0
    #allocation2 [shape = 'u8[2048]{0}', space=vmem, size = 0x800, scoped, tag = 'input window, operand 0, single buffered']
    #allocation3 [shape = 's32[1]{0}', space=sflag, size = 0x4, scoped, tag = 'scoped memory for tpu_custom_call.1']
    #allocation4 [shape = 's32[1]{0}', space=sflag, size = 0x4, scoped, tag = 'scoped memory for tpu_custom_call.1']
    #allocation5 [shape = 'u8[2048]{0}', space=vmem, size = 0x800, scoped, tag = 'input window, operand 1, single buffered']
    #allocation6 [shape = 's32[1]{0}', space=sflag, size = 0x4, scoped, tag = 'scoped memory for tpu_custom_call.1']
    #allocation7 [shape = 'u8[512]{0}', space=vmem, size = 0x400, scoped, tag = 'output window, operand 0, single buffered']
    %7 = vsyncpa [#allocation3], 0
    %8 = vsyncpa [#allocation6], 0
    %9 = vsyncpa [#allocation4], 0
    // Predicated region
    $region2: #{tpu_custom_call.1} parent=1 // pred_check
      _
    $region3: #{tpu_custom_call.1} parent=1 // pred_check_branch
      %11 = sbr.rel (0) target = $region5
    $region4: #{tpu_custom_call.1} parent=1 // pred_region
      %s13 = ssub.s32 64, 64
      %14 = vsyncadd [#allocation3], %s13
      %s16 = sshll.u32 [#allocation2], 4
      %s17 = int_to_ptr.vmem [resolvable:$true] %s16
      %19 = dma.hbm_to_vmem [thread:$0]  %s0, 64, %s17, [#allocation3]
    $region5: #{tpu_custom_call.1} parent=1 // pred_fallthru
      _
    // Predicated region
    $region6: #{tpu_custom_call.1} parent=1 // pred_check
      _
    $region7: #{tpu_custom_call.1} parent=1 // pred_check_branch
      %21 = sbr.rel (0) target = $region9
    $region8: #{tpu_custom_call.1} parent=1 // pred_region
      %s23 = ssub.s32 64, 64
      %24 = vsyncadd [#allocation6], %s23
      %s26 = sshll.u32 [#allocation5], 4
      %s27 = int_to_ptr.vmem [resolvable:$true] %s26
      %29 = dma.hbm_to_vmem [thread:$0]  %s1, 64, %s27, [#allocation6]
    $region9: #{tpu_custom_call.1} parent=1 // pred_fallthru
      _
    // Predicated region
    $region10: #{tpu_custom_call.1} parent=1 // pred_check
      _
    $region11: #{tpu_custom_call.1} parent=1 // pred_check_branch
      %31 = sbr.rel (0) target = $region13
    $region12: #{tpu_custom_call.1} parent=1 // pred_region
      %32 = dma.done [#allocation3], 64
    $region13: #{tpu_custom_call.1} parent=1 // pred_fallthru
      _
    // Predicated region
    $region14: #{tpu_custom_call.1} parent=1 // pred_check
      _
    $region15: #{tpu_custom_call.1} parent=1 // pred_check_branch
      %34 = sbr.rel (0) target = $region17
    $region16: #{tpu_custom_call.1} parent=1 // pred_region
      %35 = dma.done [#allocation6], 64
    $region17: #{tpu_custom_call.1} parent=1 // pred_fallthru
      _
    %v36 = vld [vmem:[#allocation2] sm:$0x7]
    %v37 = vld [vmem:[#allocation5] sm:$0x7]
    %v38 = vmul.f32 %v37, 0.0033333334
    %v39 = vsub.f32 %v38, %v36
    %v40 = vmax.f32 %v39, 0.0
    %v41 = vmul.f32 %v36, %v37
    %v42 = vadd.f32 %v40, %v41
    %vm43 = vcmask 1042432
    %v44 = vsel %vm43, %v42, 0.0
    %v45 = vrot.slane %v44, 4
    %v46 = vadd.f32 %v44, %v45
    %v47 = vrot.slane %v46, 2
    %v48 = vadd.f32 %v46, %v47
    %v49 = vrot.slane %v48, 1
    %v50 = vadd.f32 %v48, %v49
    %v51 = vsub.f32 0.0, %v50
    %52 = vst [vmem:[#allocation7] sm:$0x1] %v51
    // Predicated region
    $region18: #{tpu_custom_call.1} parent=1 // pred_check
      _
    $region19: #{tpu_custom_call.1} parent=1 // pred_check_branch
      %54 = sbr.rel (0) target = $region21
    $region20: #{tpu_custom_call.1} parent=1 // pred_region
      %s56 = ssub.s32 16, 16
      %57 = vsyncadd [#allocation4], %s56
      %s59 = sshll.u32 [#allocation7], 4
      %s60 = int_to_ptr.vmem [resolvable:$true] %s59
      %62 = dma.vmem_to_hbm [thread:$0]  %s60, 16, %s2, [#allocation4]
    $region21: #{tpu_custom_call.1} parent=1 // pred_fallthru
      _
    // Predicated region
    $region22: #{tpu_custom_call.1} parent=1 // pred_check
      _
    $region23: #{tpu_custom_call.1} parent=1 // pred_check_branch
      %64 = sbr.rel (0) target = $region25
    $region24: #{tpu_custom_call.1} parent=1 // pred_region
      %65 = dma.done [#allocation4], 16
    $region25: #{tpu_custom_call.1} parent=1 // pred_fallthru
      _
    %66 = vsyncpa [#allocation3], 1
    %67 = vsyncpa [#allocation6], 1
    %68 = vsyncpa [#allocation4], 1

</llo_original>
